<compile_context>
chip_gen: v7x
topology: tpu7x:2x2x1
jax: 0.10.0
libtpu: 0.0.40
codegen_flags: <defaults>
</compile_context>

<pallas_src>
import jax
import jax.numpy as jnp
from jax.experimental import pallas as pl
from jax.experimental.pallas import tpu as pltpu

_LANE = 128
_DEFAULT_TILE_BYTES = 4 * 1024 * 1024   # per-stream tile target (v6e/v7x sweet spot)
_VMEM_BUDGET_BYTES = 48 * 1024 * 1024   # double-buffered all-stream cap; safe on v7x 64 MiB
_TWO_STEP_BYTES = 512 * 1024            # above this, force >=2 grid steps (v7x dual-TC)
_MIN_PALLAS_BYTES = 64 * 1024           # below this, fused XLA multiply wins (launch overhead)
                                        # (a whole-model pass would set this ~1-4 MiB)


def _ceil_div(a, b):
    return -(-a // b)


def _round_up(a, b):
    return _ceil_div(a, b) * b


# ---------------------------------------------------------------------------
# Pallas kernel: one (TR, C) tile, elementwise or row-broadcast multiply.
#   x_ref: (TR, C), m_ref: (TR, C) or (TR, 1)  -> o_ref: (TR, C)
# ---------------------------------------------------------------------------
def _mask_mul_kernel(x_ref, m_ref, o_ref):
    # Multiply in the jnp-promoted dtype, cast once on the way out.
    o_ref[...] = (x_ref[...] * m_ref[...]).astype(o_ref.dtype)


def _mask_mul_2d(x2, m2, out_dtype, *, target_tile_bytes, donate=False):
    """Row-tiled pallas_call: x2 (R, C) * m2 (R, C) or (R, 1) -> (R, C)."""
    rows, cols = x2.shape
    mcols = m2.shape[1]
    x_sz = jnp.dtype(x2.dtype).itemsize
    m_sz = jnp.dtype(m2.dtype).itemsize
    o_sz = jnp.dtype(out_dtype).itemsize
    sublane = 32 // min(x_sz, m_sz, o_sz)              # 8 f32 / 16 bf16 / 32 int8
    row_bytes = cols * (x_sz + o_sz) + mcols * m_sz    # live bytes/row, all streams
    total_bytes = rows * row_bytes

    # Row tile: largest single-stream tile ~= target_tile_bytes, capped so the
    # double-buffered all-stream footprint stays inside _VMEM_BUDGET_BYTES.
    tr_target = max(1, target_tile_bytes // (cols * max(x_sz, o_sz)))
    tr_vmem = max(1, _VMEM_BUDGET_BYTES // (2 * row_bytes))
    tr = min(rows, tr_target, tr_vmem)
    if tr >= rows:
        tr = rows
        if total_bytes >= _TWO_STEP_BYTES and rows >= 2 * sublane:
            # Medium/large tensor that fits one tile: split into 2 grid steps
            # so both v7x TensorCores get streaming work.
            tr = min(rows, _round_up(_ceil_div(rows, 2), sublane))
    else:
        tr = max(sublane, (tr // sublane) * sublane)   # sublane-aligned row tile
    tr = int(tr)

    grid = (pl.cdiv(rows, tr),)
    # Scoped-VMEM limit from the actual footprint (2 buffers per stream) plus
    # headroom -> independent of each generation's scoped default.
    vmem_limit = int(2 * tr * row_bytes + (4 << 20))

    # In-place only when the caller explicitly donates x and dtypes match.
    # Callers that still need the unmasked parameter must keep donate=False.
    aliases = {0: 0} if (donate and x2.dtype == jnp.dtype(out_dtype)) else {}

    # TODO(synk): the tiny (O,1) channel mask is still re-DMA'd per grid step;
    # keeping it VMEM-resident (constant index_map + in-kernel pl.ds slice)
    # would shave one small DMA per step but needs ragged-last-block care.
    return pl.pallas_call(
        _mask_mul_kernel,
        out_shape=jax.ShapeDtypeStruct((rows, cols), out_dtype),
        grid=grid,
        in_specs=[
            pl.BlockSpec((tr, cols), lambda i: (i, 0)),
            pl.BlockSpec((tr, mcols), lambda i: (i, 0)),
        ],
        out_specs=pl.BlockSpec((tr, cols), lambda i: (i, 0)),
        compiler_params=pltpu.CompilerParams(
            # TODO(synk): if a v7x profile shows only one TC streaming, switch
            # this axis to pltpu.CORE_PARALLEL (or a core_map split).
            dimension_semantics=("parallel",),
            vmem_limit_bytes=vmem_limit,
        ),
        input_output_aliases=aliases,
    )(x2, m2)


def _lane_dense_view(n):
    """(rows, cols) with cols a multiple of 128 dividing n (requires n % 128 == 0)."""
    lane_blocks = n // _LANE
    for d in range(min(lane_blocks, 64), 0, -1):       # cols <= 8192 lanes
        if lane_blocks % d == 0:
            return n // (d * _LANE), d * _LANE
    return lane_blocks, _LANE


def _same_shape_forward(x, mask, out_dtype, *, target_tile_bytes,
                        min_pallas_bytes, donate):
    """out = x * mask with mask.shape == x.shape."""
    n = x.size
    nbytes = n * jnp.dtype(x.dtype).itemsize
    if nbytes < min_pallas_bytes or n % _LANE != 0:
        # Small tensors: per-call overhead dominates.  Lane-misaligned sizes:
        # the old pad/slice round-trips each cost an extra full HBM pass, so
        # XLA's fused multiply (already at the roofline) is strictly better.
        return (x * mask).astype(out_dtype)
    rows, cols = _lane_dense_view(n)
    out2 = _mask_mul_2d(x.reshape(rows, cols), mask.reshape(rows, cols),
                        out_dtype, target_tile_bytes=target_tile_bytes,
                        donate=donate)
    return out2.reshape(x.shape)


# ---------------------------------------------------------------------------
# forward() equivalent
# ---------------------------------------------------------------------------
def soft_pruning_forward(x, mask, channel_pruning, *,
                         target_tile_bytes=_DEFAULT_TILE_BYTES,
                         min_pallas_bytes=_MIN_PALLAS_BYTES,
                         cast_mask_to_input_dtype=False,
                         donate=False):
    """Equivalent of SoftPruningParametrization.forward(X)."""
    # TODO(synk): a whole-model pruning pass should fuse all parameters into a
    # single flat 128-aligned slab driven by one pallas_call (scalar-prefetch
    # offset/mask-index table) instead of one launch per parameter.
    x = jnp.asarray(x)
    mask = jnp.asarray(mask)
    if cast_mask_to_input_dtype:
        # Perf option: keep bf16/fp8 weights from being written back as f32
        # when the mask lives in f32 (halves the output stream).  Diverges
        # from strict torch type promotion, so off by default.
        mask = mask.astype(x.dtype)
    # NOTE: jnp.result_type follows NumPy/JAX promotion; exotic int/f64 mixes
    # may differ from torch (e.g. f64 silently demoted to f32 without x64).
    out_dtype = jnp.result_type(x.dtype, mask.dtype)

    if channel_pruning:
        if x.ndim == 4:
            o = x.shape[0]
            c = x.size // o
            if mask.size != o:
                raise ValueError(
                    f"channel_pruning expects a per-output-channel mask of "
                    f"size {o}, got shape {mask.shape}")
            nbytes = x.size * jnp.dtype(x.dtype).itemsize
            if nbytes < min_pallas_bytes or c < _LANE:
                # Tiny weights / very short rows (<128 lanes): a kernel launch
                # plus heavily masked partial-lane stores loses to fused XLA.
                return (x * mask.reshape((o,) + (1,) * (x.ndim - 1))).astype(out_dtype)
            # Flatten to (O, I*kH*kW): mask stays tiny at (O, 1), so HBM
            # traffic is ~2 passes (read x, write out) per element.
            out2 = _mask_mul_2d(x.reshape(o, c), mask.reshape(o, 1), out_dtype,
                                target_tile_bytes=target_tile_bytes,
                                donate=donate)
            return out2.reshape(x.shape)
        elif x.ndim == 1:
            if mask.size != x.size:
                raise ValueError("1-D channel pruning expects mask.size == X.size")
            return _same_shape_forward(x, mask.reshape(x.shape), out_dtype,
                                       target_tile_bytes=target_tile_bytes,
                                       min_pallas_bytes=min_pallas_bytes,
                                       donate=donate)
        else:
            # PyTorch original silently returns None here; fail loudly instead.
            raise ValueError(
                f"channel_pruning expects a 1-D or 4-D tensor, got ndim={x.ndim}")
    else:
        if tuple(mask.shape) != tuple(x.shape):
            raise ValueError(
                f"unstructured pruning expects mask.shape == X.shape, "
                f"got {mask.shape} vs {x.shape}")
        return _same_shape_forward(x, mask, out_dtype,
                                   target_tile_bytes=target_tile_bytes,
                                   min_pallas_bytes=min_pallas_bytes,
                                   donate=donate)


# ---------------------------------------------------------------------------
# __init__ mask construction (base-class semantics, deterministic, no files)
# ---------------------------------------------------------------------------
def init_soft_pruning_mask(net_weight, channel_pruning, pruning_ratio,
                           binary_mask=False):
    """Mirrors SoftPruningParametrization.__init__ mask selection.
    Base-class create_mask() returns ones_like(net_weight)."""
    is_depthwise = net_weight.shape[1] == 1 if net_weight.ndim >= 2 else False
    nelem = net_weight.size

    if int(pruning_ratio * nelem) == 0 or is_depthwise:
        mask = (jnp.ones((net_weight.shape[0],), net_weight.dtype)
                if channel_pruning else jnp.ones_like(net_weight))
    elif net_weight.shape[0] <= 32 and channel_pruning:
        mask = jnp.ones((net_weight.shape[0],), net_weight.dtype)
    else:
        # create_mask (base class) -> ones; channel pruning needs per-channel.
        mask = (jnp.ones((net_weight.shape[0],), net_weight.dtype)
                if channel_pruning else jnp.ones_like(net_weight))

    if binary_mask:
        mask = (mask >= 0.5).astype(net_weight.dtype)
    return mask
    # TODO(synk): torch.fx node / module bookkeeping and mask.to(device) moves
    # have no Pallas equivalent and are intentionally omitted.


if __name__ == "__main__":
    key = jax.random.PRNGKey(0)
    k1, k2, k3, k4, k5 = jax.random.split(key, 5)
    ok = True

    # 1. channel pruning, 4-D conv weight big enough for the Pallas path:
    #    (64, 32, 3, 3) f32 -> (O=64, c=288) tiles, tiny (O,1) mask stream.
    w = jax.random.normal(k1, (64, 32, 3, 3), dtype=jnp.float32)
    maskc = (jnp.arange(64) % 2).astype(jnp.float32)
    out = jax.block_until_ready(soft_pruning_forward(w, maskc, True))
    ok &= bool(jnp.allclose(out, w * maskc[:, None, None, None], atol=1e-6))

    # 1b. same weight, tiny tile target -> multi-step row grid (pipelined path)
    out = jax.block_until_ready(
        soft_pruning_forward(w, maskc, True, target_tile_bytes=16 * 1024))
    ok &= bool(jnp.allclose(out, w * maskc[:, None, None, None], atol=1e-6))

    # 2. unstructured pruning, 128-aligned 512 KiB tensor -> lane-dense Pallas
    #    path that also exercises the >=2-grid-step dual-TC split.
    x2 = jax.random.normal(k2, (16, 32, 16, 16), dtype=jnp.float32)
    m2 = (jax.random.uniform(k3, x2.shape) > 0.6).astype(jnp.float32)
    out = jax.block_until_ready(soft_pruning_forward(x2, m2, False))
    ok &= bool(jnp.allclose(out, x2 * m2, atol=1e-6))

    # 3. bf16 weight + f32 mask with cast_mask_to_input_dtype=True -> bf16 out
    wb = jax.random.normal(k4, (64, 32, 3, 3), dtype=jnp.bfloat16)
    out = jax.block_until_ready(
        soft_pruning_forward(wb, maskc, True, cast_mask_to_input_dtype=True))
    ref = wb * maskc.astype(jnp.bfloat16)[:, None, None, None]
    ok &= bool(out.dtype == jnp.bfloat16)
    ok &= bool(jnp.allclose(out.astype(jnp.float32), ref.astype(jnp.float32),
                            atol=1e-2, rtol=1e-2))

    # 4. tiny 1-D channel parameter (batchnorm weight) -> XLA fallback path
    x1d = jax.random.normal(k5, (64,), dtype=jnp.float32)
    out = jax.block_until_ready(soft_pruning_forward(x1d, maskc, True))
    ok &= bool(jnp.allclose(out, x1d * maskc, atol=1e-6))

    # 5. tiny misaligned 4-D weight, ones mask straight from __init__ -> XLA
    w0 = jax.random.normal(k1, (4, 3, 3, 3), dtype=jnp.float32)
    m0 = init_soft_pruning_mask(w0, channel_pruning=True, pruning_ratio=0.6)
    out = jax.block_until_ready(soft_pruning_forward(w0, m0, True))
    ok &= bool(jnp.allclose(out, w0 * m0[:, None, None, None], atol=1e-6))

    # 6. force the Pallas kernel on a tiny 128-aligned vector (single (1, n)
    #    full-dims block edge case)
    xv = jax.random.normal(k2, (256,), dtype=jnp.float32)
    mv = (jnp.arange(256) % 3 == 0).astype(jnp.float32)
    out = jax.block_until_ready(
        soft_pruning_forward(xv, mv, False, min_pallas_bytes=0))
    ok &= bool(jnp.allclose(out, xv * mv, atol=1e-6))

    if ok:
        print("KERNEL_OK")
    else:
        raise SystemExit("mismatch vs reference")
</pallas_src>

<mosaic_0001>
module attributes {stable_mosaic.version = 11 : i64} {
  func.func @_mask_mul_kernel(%arg0: i32, %arg1: memref<64x288xf32, #tpu.memory_space<vmem>>, %arg2: memref<64x1xf32, #tpu.memory_space<vmem>>, %arg3: memref<64x288xf32, #tpu.memory_space<vmem>>) attributes {dimension_semantics = [#tpu.dimension_semantics<parallel>], iteration_bounds = array<i64: 1>, scalar_prefetch = 0 : i64, scratch_operands = 0 : i64, tpu.core_type = #tpu.core_type<tc>, window_params = [{transform_indices = @transform_0, window_bounds = array<i64: 64, 288>}, {transform_indices = @transform_1, window_bounds = array<i64: 64, 1>}, {transform_indices = @transform_2, window_bounds = array<i64: 64, 288>}]} {
    %c0 = arith.constant 0 : index
    %c0_0 = arith.constant 0 : index
    %0 = vector.load %arg1[%c0, %c0_0] : memref<64x288xf32, #tpu.memory_space<vmem>>, vector<64x288xf32>
    %c0_1 = arith.constant 0 : index
    %c0_2 = arith.constant 0 : index
    %1 = vector.load %arg2[%c0_1, %c0_2] : memref<64x1xf32, #tpu.memory_space<vmem>>, vector<64x1xf32>
    %2 = vector.broadcast %1 : vector<64x1xf32> to vector<64x288xf32>
    %3 = arith.mulf %0, %2 : vector<64x288xf32>
    %c0_3 = arith.constant 0 : index
    %c0_4 = arith.constant 0 : index
    %4 = vector.load %arg3[%c0_3, %c0_4] : memref<64x288xf32, #tpu.memory_space<vmem>>, vector<64x288xf32>
    tpu.vector_store %arg3[%c0_3, %c0_4], %3 {strides = array<i32>} : memref<64x288xf32, #tpu.memory_space<vmem>>, vector<64x288xf32>,
    return
  }
  func.func @transform_0(%arg0: i32) -> (i32, i32) {
    %c0_i32 = arith.constant 0 : i32
    %c0_i32_0 = arith.constant 0 : i32
    return %arg0, %c0_i32 : i32, i32
  }
  func.func @transform_1(%arg0: i32) -> (i32, i32) {
    %c0_i32 = arith.constant 0 : i32
    %c0_i32_0 = arith.constant 0 : i32
    return %arg0, %c0_i32 : i32, i32
  }
  func.func @transform_2(%arg0: i32) -> (i32, i32) {
    %c0_i32 = arith.constant 0 : i32
    %c0_i32_0 = arith.constant 0 : i32
    return %arg0, %c0_i32 : i32, i32
  }
}

</mosaic_0001>

<llo_original>
// kernel: tpu_custom_call.1
$region0: #{tpu_custom_call.1}
  #allocation0 [shape = 'u32[]', space=smem, size = 0x4, offset = 0x4, fixed_abs, tag = 'smem constant byte address 0x4 - core index']
  #allocation1 [shape = 'u32[144,128]{1,0:T(1,128)}', space=vmem, size = 0x12000, scoped, tag = 'internal scratch']
  %s0 = inlined_call_operand.hbm [shape: f32[64,288], index: 0, kind: input, shape index: {}]
  %s1 = inlined_call_operand.vmem [shape: f32[64,1], index: 1, kind: input, shape index: {}]
  %s2 = inlined_call_operand.hbm [shape: f32[64,288], index: 2, kind: output, shape index: {}]
  %s3 = sld [smem:[#allocation0]]
  $region22: #{tpu_custom_call.1} parent=0
    _
  %s5 = ssub.s32 1, %s3
  %s6 = scalar_select 0, %s5, %s3
  $region1: #{tpu_custom_call.1} parent=0
    #allocation2 [shape = 'u8[98304]{0}', space=vmem, size = 0x18000, scoped, tag = 'input window, operand 0, single buffered']
    #allocation3 [shape = 's32[1]{0}', space=sflag, size = 0x4, scoped, tag = 'scoped memory for tpu_custom_call.1']
    #allocation4 [shape = 's32[1]{0}', space=sflag, size = 0x4, scoped, tag = 'scoped memory for tpu_custom_call.1']
    #allocation5 [shape = 'u8[98304]{0}', space=vmem, size = 0x18000, scoped, tag = 'output window, operand 0, single buffered']
    %7 = vsyncpa [#allocation3], 0
    %8 = vsyncpa [#allocation4], 0
    // Predicated region
    $region2: #{tpu_custom_call.1} parent=1 // pred_check
      _
    $region3: #{tpu_custom_call.1} parent=1 // pred_check_branch
      %10 = sbr.rel (0) target = $region5
    $region4: #{tpu_custom_call.1} parent=1 // pred_region
      %s12 = ssub.s32 3072, 3072
      %13 = vsyncadd [#allocation3], %s12
      %s14 = sshll.u32 [#allocation2], 4
      %s15 = int_to_ptr.vmem [resolvable:$true] %s14
      %20 = dma.hbm_to_vmem [thread:$0]  %s0, 3072, %s15, [#allocation3], 384, 384, 24
    $region5: #{tpu_custom_call.1} parent=1 // pred_fallthru
      _
    // Predicated region
    $region6: #{tpu_custom_call.1} parent=1 // pred_check
      _
    $region7: #{tpu_custom_call.1} parent=1 // pred_check_branch
      %22 = sbr.rel (0) target = $region9
    $region8: #{tpu_custom_call.1} parent=1 // pred_region
      _
    $region9: #{tpu_custom_call.1} parent=1 // pred_fallthru
      _
    // Predicated region
    $region10: #{tpu_custom_call.1} parent=1 // pred_check
      _
    $region11: #{tpu_custom_call.1} parent=1 // pred_check_branch
      %24 = sbr.rel (0) target = $region13
    $region12: #{tpu_custom_call.1} parent=1 // pred_region
      %25 = dma.done [#allocation3], 3072
    $region13: #{tpu_custom_call.1} parent=1 // pred_fallthru
      _
    %v26 = vld [vmem:[#allocation2] sm:$0xff]
    %v27 = vld [vmem:[#allocation2 + $0x8] sm:$0xff]
    %v28 = vld [vmem:[#allocation2 + $0x10] sm:$0xff]
    %v29 = vld [vmem:[#allocation2 + $0x18] sm:$0xff]
    %v30 = vld [vmem:[#allocation2 + $0x20] sm:$0xff]
    %v31 = vld [vmem:[#allocation2 + $0x28] sm:$0xff]
    %v32 = vld [vmem:[#allocation2 + $0x30] sm:$0xff]
    %v33 = vld [vmem:[#allocation2 + $0x38] sm:$0xff]
    %v34 = vld [vmem:[#allocation2 + $0x40] sm:$0xff]
    %v35 = vld [vmem:[#allocation2 + $0x48] sm:$0xff]
    %v36 = vld [vmem:[#allocation2 + $0x50] sm:$0xff]
    %v37 = vld [vmem:[#allocation2 + $0x58] sm:$0xff]
    %v38 = vld [vmem:[#allocation2 + $0x60] sm:$0xff]
    %v39 = vld [vmem:[#allocation2 + $0x68] sm:$0xff]
    %v40 = vld [vmem:[#allocation2 + $0x70] sm:$0xff]
    %v41 = vld [vmem:[#allocation2 + $0x78] sm:$0xff]
    %v42 = vld [vmem:[#allocation2 + $0x80] sm:$0xff]
    %v43 = vld [vmem:[#allocation2 + $0x88] sm:$0xff]
    %v44 = vld [vmem:[#allocation2 + $0x90] sm:$0xff]
    %v45 = vld [vmem:[#allocation2 + $0x98] sm:$0xff]
    %v46 = vld [vmem:[#allocation2 + $0xa0] sm:$0xff]
    %v47 = vld [vmem:[#allocation2 + $0xa8] sm:$0xff]
    %v48 = vld [vmem:[#allocation2 + $0xb0] sm:$0xff]
    %v49 = vld [vmem:[#allocation2 + $0xb8] sm:$0xff]
    %v50 = vld [vmem:[%s1] sm:$0xff]
    %v51 = vld [vmem:[%s1 + $0x8] sm:$0xff]
    %v52 = vld [vmem:[%s1 + $0x10] sm:$0xff]
    %v53 = vld [vmem:[%s1 + $0x18] sm:$0xff]
    %v54 = vld [vmem:[%s1 + $0x20] sm:$0xff]
    %v55 = vld [vmem:[%s1 + $0x28] sm:$0xff]
    %v56 = vld [vmem:[%s1 + $0x30] sm:$0xff]
    %v57 = vld [vmem:[%s1 + $0x38] sm:$0xff]
    %59 = vset.pattern.permute.xlu0 0
    %60 = vperm.xlu0 %59, %v50
    %v61 = vpop.permute.xlu0 %60
    %64 = vset.pattern.permute.xlu0 0
    %65 = vperm.xlu0 %64, %v51
    %v66 = vpop.permute.xlu0 %65
    %69 = vset.pattern.permute.xlu0 0
    %70 = vperm.xlu0 %69, %v52
    %v71 = vpop.permute.xlu0 %70
    %74 = vset.pattern.permute.xlu0 0
    %75 = vperm.xlu0 %74, %v53
    %v76 = vpop.permute.xlu0 %75
    %79 = vset.pattern.permute.xlu0 0
    %80 = vperm.xlu0 %79, %v54
    %v81 = vpop.permute.xlu0 %80
    %84 = vset.pattern.permute.xlu0 0
    %85 = vperm.xlu0 %84, %v55
    %v86 = vpop.permute.xlu0 %85
    %89 = vset.pattern.permute.xlu0 0
    %90 = vperm.xlu0 %89, %v56
    %v91 = vpop.permute.xlu0 %90
    %94 = vset.pattern.permute.xlu0 0
    %95 = vperm.xlu0 %94, %v57
    %v96 = vpop.permute.xlu0 %95
    %v98 = vmul.f32 %v26, %v61
    %v99 = vmul.f32 %v27, %v61
    %v100 = vmul.f32 %v28, %v61
    %v101 = vmul.f32 %v29, %v66
    %v102 = vmul.f32 %v30, %v66
    %v103 = vmul.f32 %v31, %v66
    %v104 = vmul.f32 %v32, %v71
    %v105 = vmul.f32 %v33, %v71
    %v106 = vmul.f32 %v34, %v71
    %v107 = vmul.f32 %v35, %v76
    %v108 = vmul.f32 %v36, %v76
    %v109 = vmul.f32 %v37, %v76
    %v110 = vmul.f32 %v38, %v81
    %v111 = vmul.f32 %v39, %v81
    %v112 = vmul.f32 %v40, %v81
    %v113 = vmul.f32 %v41, %v86
    %v114 = vmul.f32 %v42, %v86
    %v115 = vmul.f32 %v43, %v86
    %v116 = vmul.f32 %v44, %v91
    %v117 = vmul.f32 %v45, %v91
    %v118 = vmul.f32 %v46, %v91
    %v119 = vmul.f32 %v47, %v96
    %v120 = vmul.f32 %v48, %v96
    %v121 = vmul.f32 %v49, %v96
    %122 = vst [vmem:[#allocation5] sm:$0xff] %v98
    %123 = vst [vmem:[#allocation5 + $0x8] sm:$0xff] %v99
    %vm124 = vcmask 261120
    %125 = vst.msk [vmem:[#allocation5 + $0x10] sm:$0xff] %vm124, %v100
    %126 = vst [vmem:[#allocation5 + $0x18] sm:$0xff] %v101
    %127 = vst [vmem:[#allocation5 + $0x20] sm:$0xff] %v102
    %128 = vst.msk [vmem:[#allocation5 + $0x28] sm:$0xff] %vm124, %v103
    %129 = vst [vmem:[#allocation5 + $0x30] sm:$0xff] %v104
    %130 = vst [vmem:[#allocation5 + $0x38] sm:$0xff] %v105
    %131 = vst.msk [vmem:[#allocation5 + $0x40] sm:$0xff] %vm124, %v106
    %132 = vst [vmem:[#allocation5 + $0x48] sm:$0xff] %v107
    %133 = vst [vmem:[#allocation5 + $0x50] sm:$0xff] %v108
    %134 = vst.msk [vmem:[#allocation5 + $0x58] sm:$0xff] %vm124, %v109
    %135 = vst [vmem:[#allocation5 + $0x60] sm:$0xff] %v110
    %136 = vst [vmem:[#allocation5 + $0x68] sm:$0xff] %v111
    %137 = vst.msk [vmem:[#allocation5 + $0x70] sm:$0xff] %vm124, %v112
    %138 = vst [vmem:[#allocation5 + $0x78] sm:$0xff] %v113
    %139 = vst [vmem:[#allocation5 + $0x80] sm:$0xff] %v114
    %140 = vst.msk [vmem:[#allocation5 + $0x88] sm:$0xff] %vm124, %v115
    %141 = vst [vmem:[#allocation5 + $0x90] sm:$0xff] %v116
    %142 = vst [vmem:[#allocation5 + $0x98] sm:$0xff] %v117
    %143 = vst.msk [vmem:[#allocation5 + $0xa0] sm:$0xff] %vm124, %v118
    %144 = vst [vmem:[#allocation5 + $0xa8] sm:$0xff] %v119
    %145 = vst [vmem:[#allocation5 + $0xb0] sm:$0xff] %v120
    %146 = vst.msk [vmem:[#allocation5 + $0xb8] sm:$0xff] %vm124, %v121
    // Predicated region
    $region14: #{tpu_custom_call.1} parent=1 // pred_check
      _
    $region15: #{tpu_custom_call.1} parent=1 // pred_check_branch
      %148 = sbr.rel (0) target = $region17
    $region16: #{tpu_custom_call.1} parent=1 // pred_region
      %s150 = ssub.s32 3072, 3072
      %151 = vsyncadd [#allocation4], %s150
      %s152 = sshll.u32 [#allocation5], 4
      %s153 = int_to_ptr.vmem [resolvable:$true] %s152
      %158 = dma.vmem_to_hbm [thread:$0]  %s153, 3072, %s2, [#allocation4], 384, 384, 24
    $region17: #{tpu_custom_call.1} parent=1 // pred_fallthru
      _
    // Predicated region
    $region18: #{tpu_custom_call.1} parent=1 // pred_check
      _
    $region19: #{tpu_custom_call.1} parent=1 // pred_check_branch
      %160 = sbr.rel (0) target = $region21
    $region20: #{tpu_custom_call.1} parent=1 // pred_region
      %161 = dma.done [#allocation4], 3072
    $region21: #{tpu_custom_call.1} parent=1 // pred_fallthru
      _
    %162 = vsyncpa [#allocation3], 1
    %163 = vsyncpa [#allocation4], 1

</llo_original>
